<compile_context>
chip_gen: v6e
topology: v6e:2x2x1
jax: 0.10.0
libtpu: 0.0.40
codegen_flags: <defaults>
</compile_context>

<pallas_src>
import functools
import math

import jax
import jax.numpy as jnp
from jax.experimental import pallas as pl
from jax.experimental.pallas import tpu as pltpu

_SQRT1_2 = 0.70710678118654752440


@functools.lru_cache(maxsize=1)
def _bf16_vpu_available():
    # v6e / v7x VPU+EUP are bf16-capable; v5e (and older) are not.
    try:
        kind = jax.devices()[0].device_kind.lower()
    except Exception:
        return False
    return ("v6" in kind) or ("v7" in kind) or ("7x" in kind)


def _gelu_erf(x):
    # Exact (erf-based) GELU, matching torch.nn.GELU() default.  f32 math.
    # Abramowitz & Stegun 7.1.26 (|err| < 1.5e-7), exact divide (no approx recip).
    a1, a2, a3, a4, a5 = (0.254829592, -0.284496736, 1.421413741,
                          -1.453152027, 1.061405429)
    p = 0.3275911
    u = x * _SQRT1_2
    s = jnp.where(u < 0.0, -1.0, 1.0)
    au = jnp.abs(u)
    t = 1.0 / (1.0 + p * au)
    poly = ((((a5 * t + a4) * t + a3) * t + a2) * t + a1) * t
    erf = s * (1.0 - poly * jnp.exp(-au * au))
    return 0.5 * x * (1.0 + erf)


def _gelu_tanh(x):
    # tanh-approx GELU (bf16-friendly perf path; tanh -> EUP, few VALU ops).
    c0 = 0.7978845608028654  # sqrt(2/pi)
    c1 = 0.044715
    return 0.5 * x * (1.0 + jnp.tanh(c0 * (x + c1 * x * x * x)))


def _make_kernel(gelu_bf16):
    def kernel(step_ref, x_ref, h_ref, g_ref, sincos_ref,
               w1_ref, wfold_ref, wd1x_ref, wd1h_ref, wd1g_ref, wd2_ref,
               b1_ref, bfold_ref, bd2_ref, out_ref):
        cdt = w1_ref.dtype  # MXU operand dtype (bf16 or f32)

        if gelu_bf16:
            act = lambda v: _gelu_tanh(v.astype(jnp.bfloat16))
        else:
            act = _gelu_erf  # f32 in / f32 out

        # --- fused SinusoidalPositionEmbeddings -----------------------------------
        # Host-precomputed tables: row0 = freq (duplicated halves),
        # row1 = phase (0 for sin lanes, +pi/2 for cos lanes).  cos emulated as
        # sin(x + pi/2): exact math; f32 range-reduction error at step<=500 rad is
        # well under the test tolerances.
        freq = sincos_ref[0:1, :]
        phase = sincos_ref[1:2, :]
        sin_emb = jnp.sin(step_ref[...] * freq + phase)          # (TB, H) f32

        # --- step_mlp first Linear(H,2H) + GELU ------------------------------------
        t1 = jnp.dot(sin_emb.astype(cdt), w1_ref[...],
                     preferred_element_type=jnp.float32) + b1_ref[...]
        t1 = act(t1)

        # --- diffuser (mlp2) first Linear(4H,2H) with step_mlp second Linear folded in
        #   concat([x,h,t,genres]) @ Wd1  ==  x@Wd1_x + h@Wd1_h + gelu(t1)@(w2@Wd1_t)
        #                                     + genres@Wd1_g + (b2@Wd1_t + bd1)
        d = (jnp.dot(x_ref[...].astype(cdt), wd1x_ref[...],
                     preferred_element_type=jnp.float32)
             + jnp.dot(h_ref[...].astype(cdt), wd1h_ref[...],
                       preferred_element_type=jnp.float32)
             + jnp.dot(g_ref[...].astype(cdt), wd1g_ref[...],
                       preferred_element_type=jnp.float32)
             + jnp.dot(t1.astype(cdt), wfold_ref[...],
                       preferred_element_type=jnp.float32)
             + bfold_ref[...])
        d = act(d)

        # --- diffuser second Linear(2H,H) ------------------------------------------
        out_ref[...] = (jnp.dot(d.astype(cdt), wd2_ref[...],
                                preferred_element_type=jnp.float32)
                        + bd2_ref[...]).astype(out_ref.dtype)

    return kernel


@functools.partial(jax.jit, static_argnames=("compute_dtype", "gelu_dtype",
                                              "out_dtype", "block_b"))
def movietenc_forward(params, x, h, step, genres_embd, *,
                      compute_dtype=jnp.bfloat16, gelu_dtype=None,
                      out_dtype=jnp.float32, block_b=1024):
    """MovieTenc.forward (diffuser_type='mlp2') as a single fused Pallas kernel."""
    B, H = x.shape
    f32 = jnp.float32
    cdt = jnp.dtype(compute_dtype)

    if gelu_dtype is None:
        gelu_bf16 = (cdt == jnp.bfloat16) and _bf16_vpu_available()
    else:
        gelu_bf16 = jnp.dtype(gelu_dtype) == jnp.bfloat16

    # Weights are [in, out] (transpose of torch Linear.weight).  wd1 rows follow the
    # torch concat order [x | h | t | genres]; split per segment and fold w2 into the
    # t segment (same FLOPs, one fewer MXU dispatch, no (TB,H) "t" intermediate).
    wd1 = params["wd1"].astype(f32)                    # (4H, 2H)
    wd1_x = wd1[0:H].astype(cdt)
    wd1_h = wd1[H:2 * H].astype(cdt)
    wd1_t = wd1[2 * H:3 * H]                           # keep f32 for the fold
    wd1_g = wd1[3 * H:4 * H].astype(cdt)
    w1 = params["w1"].astype(cdt)                      # (H, 2H)
    w_fold = (params["w2"].astype(f32) @ wd1_t).astype(cdt)       # (2H, 2H)
    wd2 = params["wd2"].astype(cdt)                    # (2H, H)
    b1 = params["b1"].reshape(1, 2 * H).astype(f32)
    b_fold = (params["b2"].reshape(1, H).astype(f32) @ wd1_t
              + params["bd1"].reshape(1, 2 * H).astype(f32))      # (1, 2H) f32
    bd2 = params["bd2"].reshape(1, H).astype(f32)

    # Sinusoidal tables hoisted host-side: (2, H) = [freq ; phase].
    half = H // 2
    denom = float(max(half - 1, 1))
    fr = jnp.exp(jnp.arange(half, dtype=f32) * (-math.log(10000.0) / denom))
    freq = jnp.concatenate([fr, fr])
    phase = jnp.concatenate([jnp.zeros((half,), f32),
                             jnp.full((half,), 0.5 * math.pi, f32)])
    sincos = jnp.stack([freq, phase], axis=0)          # (2, H) f32

    step2d = step.astype(f32).reshape(B, 1)

    # Batch tile: sublane-aligned, at least 2 grid steps (so v7x can shard across its
    # 2 TensorCores), capped at block_b.  Non-divisible B uses Pallas partial last
    # blocks (OOB output rows are dropped; no cross-row reductions, so garbage in the
    # padded input rows never reaches valid outputs).
    ceil_rows = -(-B // 2)
    tb = min(block_b, max(8, -(-ceil_rows // 8) * 8))
    grid_b = pl.cdiv(B, tb)

    act_spec = lambda feat: pl.BlockSpec((tb, feat), lambda i: (i, 0))
    res = lambda a: pl.BlockSpec(a.shape, lambda i: (0,) * a.ndim)  # VMEM-resident

    out = pl.pallas_call(
        _make_kernel(gelu_bf16),
        grid=(grid_b,),
        in_specs=[act_spec(1), act_spec(H), act_spec(H), act_spec(H),
                  res(sincos), res(w1), res(w_fold),
                  res(wd1_x), res(wd1_h), res(wd1_g), res(wd2),
                  res(b1), res(b_fold), res(bd2)],
        out_specs=pl.BlockSpec((tb, H), lambda i: (i, 0)),
        out_shape=jax.ShapeDtypeStruct((B, H), jnp.dtype(out_dtype)),
        compiler_params=pltpu.CompilerParams(
            dimension_semantics=("parallel",)),
    )(step2d, x.astype(f32), h.astype(f32), genres_embd.astype(f32),
      sincos, w1, w_fold, wd1_x, wd1_h, wd1_g, wd2, b1, b_fold, bd2)
    return out


def _ref_forward(params, x, h, step, genres):
    """Pure-JAX f32 reference mirroring the PyTorch forward (erf-based GELU)."""
    H = x.shape[1]
    half = H // 2
    freq = jnp.exp(jnp.arange(half, dtype=jnp.float32)
                   * -(math.log(10000.0) / (half - 1)))
    ang = step.astype(jnp.float32)[:, None] * freq[None, :]
    se = jnp.concatenate([jnp.sin(ang), jnp.cos(ang)], axis=-1)
    gelu = lambda v: 0.5 * v * (1.0 + jax.scipy.special.erf(v * _SQRT1_2))
    t = gelu(se @ params["w1"] + params["b1"]) @ params["w2"] + params["b2"]
    cat = jnp.concatenate([x, h, t, genres], axis=1)
    d = gelu(cat @ params["wd1"] + params["bd1"])
    return d @ params["wd2"] + params["bd2"]


def _linear_params(key, fan_in, fan_out):
    # Deterministic init mimicking torch.nn.Linear default U(-1/sqrt(fan_in), +...).
    kw, kb = jax.random.split(key)
    bound = 1.0 / math.sqrt(fan_in)
    w = jax.random.uniform(kw, (fan_in, fan_out), jnp.float32, -bound, bound)
    b = jax.random.uniform(kb, (1, fan_out), jnp.float32, -bound, bound)
    return w, b


if __name__ == "__main__":
    B, H = 8, 32  # batch, hidden_size (item_num / state_size unused in forward)
    key = jax.random.PRNGKey(0)
    k = jax.random.split(key, 8)

    # step_mlp: Linear(H, 2H), Linear(2H, H)
    w1, b1 = _linear_params(k[0], H, 2 * H)
    w2, b2 = _linear_params(k[1], 2 * H, H)
    # diffuser (mlp2): Linear(4H, 2H), Linear(2H, H)
    wd1, bd1 = _linear_params(k[2], 4 * H, 2 * H)
    wd2, bd2 = _linear_params(k[3], 2 * H, H)
    params = dict(w1=w1, b1=b1, w2=w2, b2=b2, wd1=wd1, bd1=bd1, wd2=wd2, bd2=bd2)

    x = jax.random.normal(k[4], (B, H), jnp.float32)        # noisy item embedding (cacu_x)
    h = jax.random.normal(k[5], (B, H), jnp.float32)        # sequence representation (cacu_h)
    genres = jax.random.normal(k[6], (B, H), jnp.float32)   # genres_embd
    step = jax.random.randint(k[7], (B,), 0, 500).astype(jnp.float32)  # diffusion timestep

    ref = _ref_forward(params, x, h, step, genres)

    # Strict parity path: f32 MXU operands + f32 erf-GELU (exact divide).
    out_f32 = jax.block_until_ready(
        movietenc_forward(params, x, h, step, genres,
                          compute_dtype=jnp.float32, gelu_dtype=jnp.float32))
    assert out_f32.shape == (B, H), out_f32.shape
    assert jnp.allclose(out_f32, ref, atol=2e-3, rtol=2e-3), \
        float(jnp.max(jnp.abs(out_f32 - ref)))

    # Default perf path: bf16 MXU operands, f32 accumulation; GELU auto-selects bf16
    # on v6e/v7x (tanh approx) and f32 (erf) elsewhere.
    out_perf = jax.block_until_ready(movietenc_forward(params, x, h, step, genres))
    assert out_perf.shape == (B, H), out_perf.shape
    assert jnp.allclose(out_perf, ref, atol=1e-1, rtol=1e-1), \
        float(jnp.max(jnp.abs(out_perf - ref)))

    # Multi-block grid + partial final block (B=50, tb=32 -> grid=(2,), no jnp.pad).
    B2 = 50
    k2 = jax.random.split(jax.random.PRNGKey(1), 4)
    x2 = jax.random.normal(k2[0], (B2, H), jnp.float32)
    h2 = jax.random.normal(k2[1], (B2, H), jnp.float32)
    g2 = jax.random.normal(k2[2], (B2, H), jnp.float32)
    s2 = jax.random.randint(k2[3], (B2,), 0, 500).astype(jnp.float32)
    out2 = jax.block_until_ready(
        movietenc_forward(params, x2, h2, s2, g2,
                          compute_dtype=jnp.float32, gelu_dtype=jnp.float32,
                          block_b=32))
    ref2 = _ref_forward(params, x2, h2, s2, g2)
    assert out2.shape == (B2, H), out2.shape
    assert not jnp.any(jnp.isnan(out2))
    assert jnp.allclose(out2, ref2, atol=2e-3, rtol=2e-3), \
        float(jnp.max(jnp.abs(out2 - ref2)))

    print("KERNEL_OK")
</pallas_src>

<mosaic_0001>
module attributes {stable_mosaic.version = 11 : i64} {
  func.func @kernel(%arg0: i32, %arg1: memref<8x1xf32, #tpu.memory_space<vmem>>, %arg2: memref<8x32xf32, #tpu.memory_space<vmem>>, %arg3: memref<8x32xf32, #tpu.memory_space<vmem>>, %arg4: memref<8x32xf32, #tpu.memory_space<vmem>>, %arg5: memref<2x32xf32, #tpu.memory_space<vmem>>, %arg6: memref<32x64xf32, #tpu.memory_space<vmem>>, %arg7: memref<64x64xf32, #tpu.memory_space<vmem>>, %arg8: memref<32x64xf32, #tpu.memory_space<vmem>>, %arg9: memref<32x64xf32, #tpu.memory_space<vmem>>, %arg10: memref<32x64xf32, #tpu.memory_space<vmem>>, %arg11: memref<64x32xf32, #tpu.memory_space<vmem>>, %arg12: memref<1x64xf32, #tpu.memory_space<vmem>>, %arg13: memref<1x64xf32, #tpu.memory_space<vmem>>, %arg14: memref<1x32xf32, #tpu.memory_space<vmem>>, %arg15: memref<8x32xf32, #tpu.memory_space<vmem>>) attributes {dimension_semantics = [#tpu.dimension_semantics<parallel>], iteration_bounds = array<i64: 1>, scalar_prefetch = 0 : i64, scratch_operands = 0 : i64, tpu.core_type = #tpu.core_type<tc>, window_params = [{transform_indices = @transform_0, window_bounds = array<i64: 8, 1>}, {transform_indices = @transform_1, window_bounds = array<i64: 8, 32>}, {transform_indices = @transform_2, window_bounds = array<i64: 8, 32>}, {transform_indices = @transform_3, window_bounds = array<i64: 8, 32>}, {pipeline_mode = #tpu.pipeline_mode<synchronous>, transform_indices = @transform_4, window_bounds = array<i64: 2, 32>}, {pipeline_mode = #tpu.pipeline_mode<synchronous>, transform_indices = @transform_5, window_bounds = array<i64: 32, 64>}, {pipeline_mode = #tpu.pipeline_mode<synchronous>, transform_indices = @transform_6, window_bounds = array<i64: 64, 64>}, {pipeline_mode = #tpu.pipeline_mode<synchronous>, transform_indices = @transform_7, window_bounds = array<i64: 32, 64>}, {pipeline_mode = #tpu.pipeline_mode<synchronous>, transform_indices = @transform_8, window_bounds = array<i64: 32, 64>}, {pipeline_mode = #tpu.pipeline_mode<synchronous>, transform_indices = @transform_9, window_bounds = array<i64: 32, 64>}, {pipeline_mode = #tpu.pipeline_mode<synchronous>, transform_indices = @transform_10, window_bounds = array<i64: 64, 32>}, {pipeline_mode = #tpu.pipeline_mode<synchronous>, transform_indices = @transform_11, window_bounds = array<i64: 1, 64>}, {pipeline_mode = #tpu.pipeline_mode<synchronous>, transform_indices = @transform_12, window_bounds = array<i64: 1, 64>}, {pipeline_mode = #tpu.pipeline_mode<synchronous>, transform_indices = @transform_13, window_bounds = array<i64: 1, 32>}, {transform_indices = @transform_14, window_bounds = array<i64: 8, 32>}]} {
    %c0 = arith.constant 0 : index
    %c0_0 = arith.constant 0 : index
    %0 = vector.load %arg5[%c0, %c0_0] : memref<2x32xf32, #tpu.memory_space<vmem>>, vector<1x32xf32>
    %c1 = arith.constant 1 : index
    %c0_1 = arith.constant 0 : index
    %1 = vector.load %arg5[%c1, %c0_1] : memref<2x32xf32, #tpu.memory_space<vmem>>, vector<1x32xf32>
    %c0_2 = arith.constant 0 : index
    %c0_3 = arith.constant 0 : index
    %2 = vector.load %arg1[%c0_2, %c0_3] : memref<8x1xf32, #tpu.memory_space<vmem>>, vector<8x1xf32>
    %3 = vector.broadcast %2 : vector<8x1xf32> to vector<8x32xf32>
    %4 = vector.broadcast %0 : vector<1x32xf32> to vector<8x32xf32>
    %5 = arith.mulf %3, %4 : vector<8x32xf32>
    %6 = vector.broadcast %1 : vector<1x32xf32> to vector<8x32xf32>
    %7 = arith.addf %5, %6 : vector<8x32xf32>
    %8 = math.sin %7 : vector<8x32xf32>
    %c0_4 = arith.constant 0 : index
    %c0_5 = arith.constant 0 : index
    %9 = vector.load %arg6[%c0_4, %c0_5] : memref<32x64xf32, #tpu.memory_space<vmem>>, vector<32x64xf32>
    %cst = arith.constant dense<0.000000e+00> : vector<8x64xf32>
    %10 = tpu.matmul %8, %9, %cst {dimension_numbers = #tpu.dot_dimension_numbers<[1], [0], [0], [1], [0, 0, 1, 1], [], []>} : vector<8x32xf32>, vector<32x64xf32>, vector<8x64xf32> -> vector<8x64xf32>
    %c0_6 = arith.constant 0 : index
    %c0_7 = arith.constant 0 : index
    %11 = vector.load %arg12[%c0_6, %c0_7] : memref<1x64xf32, #tpu.memory_space<vmem>>, vector<1x64xf32>
    %12 = vector.broadcast %11 : vector<1x64xf32> to vector<8x64xf32>
    %13 = arith.addf %10, %12 : vector<8x64xf32>
    %cst_8 = arith.constant 0.707106769 : f32
    %14 = vector.broadcast %cst_8 : f32 to vector<8x64xf32>
    %15 = arith.mulf %13, %14 : vector<8x64xf32>
    %cst_9 = arith.constant 0.000000e+00 : f32
    %16 = vector.broadcast %cst_9 : f32 to vector<8x64xf32>
    %17 = arith.cmpf olt, %15, %16 : vector<8x64xf32>
    %cst_10 = arith.constant -1.000000e+00 : f32
    %cst_11 = arith.constant 1.000000e+00 : f32
    %18 = vector.broadcast %cst_10 : f32 to vector<8x64xf32>
    %19 = vector.broadcast %cst_11 : f32 to vector<8x64xf32>
    %20 = arith.select %17, %18, %19 : vector<8x64xi1>, vector<8x64xf32>
    %21 = math.absf %15 : vector<8x64xf32>
    %cst_12 = arith.constant 0.327591091 : f32
    %22 = vector.broadcast %cst_12 : f32 to vector<8x64xf32>
    %23 = arith.mulf %22, %21 : vector<8x64xf32>
    %cst_13 = arith.constant 1.000000e+00 : f32
    %24 = vector.broadcast %cst_13 : f32 to vector<8x64xf32>
    %25 = arith.addf %24, %23 : vector<8x64xf32>
    %cst_14 = arith.constant 1.000000e+00 : f32
    %26 = vector.broadcast %cst_14 : f32 to vector<8x64xf32>
    %27 = arith.divf %26, %25 : vector<8x64xf32>
    %cst_15 = arith.constant 1.06140542 : f32
    %28 = vector.broadcast %cst_15 : f32 to vector<8x64xf32>
    %29 = arith.mulf %28, %27 : vector<8x64xf32>
    %cst_16 = arith.constant -1.45315206 : f32
    %30 = vector.broadcast %cst_16 : f32 to vector<8x64xf32>
    %31 = arith.addf %29, %30 : vector<8x64xf32>
    %32 = arith.mulf %31, %27 : vector<8x64xf32>
    %cst_17 = arith.constant 1.42141378 : f32
    %33 = vector.broadcast %cst_17 : f32 to vector<8x64xf32>
    %34 = arith.addf %32, %33 : vector<8x64xf32>
    %35 = arith.mulf %34, %27 : vector<8x64xf32>
    %cst_18 = arith.constant -0.284496725 : f32
    %36 = vector.broadcast %cst_18 : f32 to vector<8x64xf32>
    %37 = arith.addf %35, %36 : vector<8x64xf32>
    %38 = arith.mulf %37, %27 : vector<8x64xf32>
    %cst_19 = arith.constant 0.254829586 : f32
    %39 = vector.broadcast %cst_19 : f32 to vector<8x64xf32>
    %40 = arith.addf %38, %39 : vector<8x64xf32>
    %41 = arith.mulf %40, %27 : vector<8x64xf32>
    %cst_20 = arith.constant 0.000000e+00 : f32
    %42 = vector.broadcast %cst_20 : f32 to vector<8x64xf32>
    %43 = arith.subf %42, %21 : vector<8x64xf32>
    %44 = arith.mulf %43, %21 : vector<8x64xf32>
    %45 = math.exp %44 : vector<8x64xf32>
    %46 = arith.mulf %41, %45 : vector<8x64xf32>
    %cst_21 = arith.constant 1.000000e+00 : f32
    %47 = vector.broadcast %cst_21 : f32 to vector<8x64xf32>
    %48 = arith.subf %47, %46 : vector<8x64xf32>
    %49 = arith.mulf %20, %48 : vector<8x64xf32>
    %cst_22 = arith.constant 5.000000e-01 : f32
    %50 = vector.broadcast %cst_22 : f32 to vector<8x64xf32>
    %51 = arith.mulf %50, %13 : vector<8x64xf32>
    %cst_23 = arith.constant 1.000000e+00 : f32
    %52 = vector.broadcast %cst_23 : f32 to vector<8x64xf32>
    %53 = arith.addf %52, %49 : vector<8x64xf32>
    %54 = arith.mulf %51, %53 : vector<8x64xf32>
    %c0_24 = arith.constant 0 : index
    %c0_25 = arith.constant 0 : index
    %55 = vector.load %arg2[%c0_24, %c0_25] : memref<8x32xf32, #tpu.memory_space<vmem>>, vector<8x32xf32>
    %c0_26 = arith.constant 0 : index
    %c0_27 = arith.constant 0 : index
    %56 = vector.load %arg8[%c0_26, %c0_27] : memref<32x64xf32, #tpu.memory_space<vmem>>, vector<32x64xf32>
    %cst_28 = arith.constant dense<0.000000e+00> : vector<8x64xf32>
    %57 = tpu.matmul %55, %56, %cst_28 {dimension_numbers = #tpu.dot_dimension_numbers<[1], [0], [0], [1], [0, 0, 1, 1], [], []>} : vector<8x32xf32>, vector<32x64xf32>, vector<8x64xf32> -> vector<8x64xf32>
    %c0_29 = arith.constant 0 : index
    %c0_30 = arith.constant 0 : index
    %58 = vector.load %arg3[%c0_29, %c0_30] : memref<8x32xf32, #tpu.memory_space<vmem>>, vector<8x32xf32>
    %c0_31 = arith.constant 0 : index
    %c0_32 = arith.constant 0 : index
    %59 = vector.load %arg9[%c0_31, %c0_32] : memref<32x64xf32, #tpu.memory_space<vmem>>, vector<32x64xf32>
    %cst_33 = arith.constant dense<0.000000e+00> : vector<8x64xf32>
    %60 = tpu.matmul %58, %59, %cst_33 {dimension_numbers = #tpu.dot_dimension_numbers<[1], [0], [0], [1], [0, 0, 1, 1], [], []>} : vector<8x32xf32>, vector<32x64xf32>, vector<8x64xf32> -> vector<8x64xf32>
    %61 = arith.addf %57, %60 : vector<8x64xf32>
    %c0_34 = arith.constant 0 : index
    %c0_35 = arith.constant 0 : index
    %62 = vector.load %arg4[%c0_34, %c0_35] : memref<8x32xf32, #tpu.memory_space<vmem>>, vector<8x32xf32>
    %c0_36 = arith.constant 0 : index
    %c0_37 = arith.constant 0 : index
    %63 = vector.load %arg10[%c0_36, %c0_37] : memref<32x64xf32, #tpu.memory_space<vmem>>, vector<32x64xf32>
    %cst_38 = arith.constant dense<0.000000e+00> : vector<8x64xf32>
    %64 = tpu.matmul %62, %63, %cst_38 {dimension_numbers = #tpu.dot_dimension_numbers<[1], [0], [0], [1], [0, 0, 1, 1], [], []>} : vector<8x32xf32>, vector<32x64xf32>, vector<8x64xf32> -> vector<8x64xf32>
    %65 = arith.addf %61, %64 : vector<8x64xf32>
    %c0_39 = arith.constant 0 : index
    %c0_40 = arith.constant 0 : index
    %66 = vector.load %arg7[%c0_39, %c0_40] : memref<64x64xf32, #tpu.memory_space<vmem>>, vector<64x64xf32>
    %cst_41 = arith.constant dense<0.000000e+00> : vector<8x64xf32>
    %67 = tpu.matmul %54, %66, %cst_41 {dimension_numbers = #tpu.dot_dimension_numbers<[1], [0], [0], [1], [0, 0, 1, 1], [], []>} : vector<8x64xf32>, vector<64x64xf32>, vector<8x64xf32> -> vector<8x64xf32>
    %68 = arith.addf %65, %67 : vector<8x64xf32>
    %c0_42 = arith.constant 0 : index
    %c0_43 = arith.constant 0 : index
    %69 = vector.load %arg13[%c0_42, %c0_43] : memref<1x64xf32, #tpu.memory_space<vmem>>, vector<1x64xf32>
    %70 = vector.broadcast %69 : vector<1x64xf32> to vector<8x64xf32>
    %71 = arith.addf %68, %70 : vector<8x64xf32>
    %cst_44 = arith.constant 0.707106769 : f32
    %72 = vector.broadcast %cst_44 : f32 to vector<8x64xf32>
    %73 = arith.mulf %71, %72 : vector<8x64xf32>
    %cst_45 = arith.constant 0.000000e+00 : f32
    %74 = vector.broadcast %cst_45 : f32 to vector<8x64xf32>
    %75 = arith.cmpf olt, %73, %74 : vector<8x64xf32>
    %cst_46 = arith.constant -1.000000e+00 : f32
    %cst_47 = arith.constant 1.000000e+00 : f32
    %76 = vector.broadcast %cst_46 : f32 to vector<8x64xf32>
    %77 = vector.broadcast %cst_47 : f32 to vector<8x64xf32>
    %78 = arith.select %75, %76, %77 : vector<8x64xi1>, vector<8x64xf32>
    %79 = math.absf %73 : vector<8x64xf32>
    %cst_48 = arith.constant 0.327591091 : f32
    %80 = vector.broadcast %cst_48 : f32 to vector<8x64xf32>
    %81 = arith.mulf %80, %79 : vector<8x64xf32>
    %cst_49 = arith.constant 1.000000e+00 : f32
    %82 = vector.broadcast %cst_49 : f32 to vector<8x64xf32>
    %83 = arith.addf %82, %81 : vector<8x64xf32>
    %cst_50 = arith.constant 1.000000e+00 : f32
    %84 = vector.broadcast %cst_50 : f32 to vector<8x64xf32>
    %85 = arith.divf %84, %83 : vector<8x64xf32>
    %cst_51 = arith.constant 1.06140542 : f32
    %86 = vector.broadcast %cst_51 : f32 to vector<8x64xf32>
    %87 = arith.mulf %86, %85 : vector<8x64xf32>
    %cst_52 = arith.constant -1.45315206 : f32
    %88 = vector.broadcast %cst_52 : f32 to vector<8x64xf32>
    %89 = arith.addf %87, %88 : vector<8x64xf32>
    %90 = arith.mulf %89, %85 : vector<8x64xf32>
    %cst_53 = arith.constant 1.42141378 : f32
    %91 = vector.broadcast %cst_53 : f32 to vector<8x64xf32>
    %92 = arith.addf %90, %91 : vector<8x64xf32>
    %93 = arith.mulf %92, %85 : vector<8x64xf32>
    %cst_54 = arith.constant -0.284496725 : f32
    %94 = vector.broadcast %cst_54 : f32 to vector<8x64xf32>
    %95 = arith.addf %93, %94 : vector<8x64xf32>
    %96 = arith.mulf %95, %85 : vector<8x64xf32>
    %cst_55 = arith.constant 0.254829586 : f32
    %97 = vector.broadcast %cst_55 : f32 to vector<8x64xf32>
    %98 = arith.addf %96, %97 : vector<8x64xf32>
    %99 = arith.mulf %98, %85 : vector<8x64xf32>
    %cst_56 = arith.constant 0.000000e+00 : f32
    %100 = vector.broadcast %cst_56 : f32 to vector<8x64xf32>
    %101 = arith.subf %100, %79 : vector<8x64xf32>
    %102 = arith.mulf %101, %79 : vector<8x64xf32>
    %103 = math.exp %102 : vector<8x64xf32>
    %104 = arith.mulf %99, %103 : vector<8x64xf32>
    %cst_57 = arith.constant 1.000000e+00 : f32
    %105 = vector.broadcast %cst_57 : f32 to vector<8x64xf32>
    %106 = arith.subf %105, %104 : vector<8x64xf32>
    %107 = arith.mulf %78, %106 : vector<8x64xf32>
    %cst_58 = arith.constant 5.000000e-01 : f32
    %108 = vector.broadcast %cst_58 : f32 to vector<8x64xf32>
    %109 = arith.mulf %108, %71 : vector<8x64xf32>
    %cst_59 = arith.constant 1.000000e+00 : f32
    %110 = vector.broadcast %cst_59 : f32 to vector<8x64xf32>
    %111 = arith.addf %110, %107 : vector<8x64xf32>
    %112 = arith.mulf %109, %111 : vector<8x64xf32>
    %c0_60 = arith.constant 0 : index
    %c0_61 = arith.constant 0 : index
    %113 = vector.load %arg11[%c0_60, %c0_61] : memref<64x32xf32, #tpu.memory_space<vmem>>, vector<64x32xf32>
    %cst_62 = arith.constant dense<0.000000e+00> : vector<8x32xf32>
    %114 = tpu.matmul %112, %113, %cst_62 {dimension_numbers = #tpu.dot_dimension_numbers<[1], [0], [0], [1], [0, 0, 1, 1], [], []>} : vector<8x64xf32>, vector<64x32xf32>, vector<8x32xf32> -> vector<8x32xf32>
    %c0_63 = arith.constant 0 : index
    %c0_64 = arith.constant 0 : index
    %115 = vector.load %arg14[%c0_63, %c0_64] : memref<1x32xf32, #tpu.memory_space<vmem>>, vector<1x32xf32>
    %116 = vector.broadcast %115 : vector<1x32xf32> to vector<8x32xf32>
    %117 = arith.addf %114, %116 : vector<8x32xf32>
    %c0_65 = arith.constant 0 : index
    %c0_66 = arith.constant 0 : index
    %118 = vector.load %arg15[%c0_65, %c0_66] : memref<8x32xf32, #tpu.memory_space<vmem>>, vector<8x32xf32>
    tpu.vector_store %arg15[%c0_65, %c0_66], %117 {strides = array<i32>} : memref<8x32xf32, #tpu.memory_space<vmem>>, vector<8x32xf32>,
    return
  }
  func.func @transform_0(%arg0: i32) -> (i32, i32) {
    %c0_i32 = arith.constant 0 : i32
    %c0_i32_0 = arith.constant 0 : i32
    return %arg0, %c0_i32 : i32, i32
  }
  func.func @transform_1(%arg0: i32) -> (i32, i32) {
    %c0_i32 = arith.constant 0 : i32
    %c0_i32_0 = arith.constant 0 : i32
    return %arg0, %c0_i32 : i32, i32
  }
  func.func @transform_2(%arg0: i32) -> (i32, i32) {
    %c0_i32 = arith.constant 0 : i32
    %c0_i32_0 = arith.constant 0 : i32
    return %arg0, %c0_i32 : i32, i32
  }
  func.func @transform_3(%arg0: i32) -> (i32, i32) {
    %c0_i32 = arith.constant 0 : i32
    %c0_i32_0 = arith.constant 0 : i32
    return %arg0, %c0_i32 : i32, i32
  }
  func.func @transform_4(%arg0: i32) -> (i32, i32) {
    %c0_i32 = arith.constant 0 : i32
    %c0_i32_0 = arith.constant 0 : i32
    %c0_i32_1 = arith.constant 0 : i32
    return %c0_i32, %c0_i32_0 : i32, i32
  }
  func.func @transform_5(%arg0: i32) -> (i32, i32) {
    %c0_i32 = arith.constant 0 : i32
    %c0_i32_0 = arith.constant 0 : i32
    %c0_i32_1 = arith.constant 0 : i32
    return %c0_i32, %c0_i32_0 : i32, i32
  }
  func.func @transform_6(%arg0: i32) -> (i32, i32) {
    %c0_i32 = arith.constant 0 : i32
    %c0_i32_0 = arith.constant 0 : i32
    %c0_i32_1 = arith.constant 0 : i32
    return %c0_i32, %c0_i32_0 : i32, i32
  }
  func.func @transform_7(%arg0: i32) -> (i32, i32) {
    %c0_i32 = arith.constant 0 : i32
    %c0_i32_0 = arith.constant 0 : i32
    %c0_i32_1 = arith.constant 0 : i32
    return %c0_i32, %c0_i32_0 : i32, i32
  }
  func.func @transform_8(%arg0: i32) -> (i32, i32) {
    %c0_i32 = arith.constant 0 : i32
    %c0_i32_0 = arith.constant 0 : i32
    %c0_i32_1 = arith.constant 0 : i32
    return %c0_i32, %c0_i32_0 : i32, i32
  }
  func.func @transform_9(%arg0: i32) -> (i32, i32) {
    %c0_i32 = arith.constant 0 : i32
    %c0_i32_0 = arith.constant 0 : i32
    %c0_i32_1 = arith.constant 0 : i32
    return %c0_i32, %c0_i32_0 : i32, i32
  }
  func.func @transform_10(%arg0: i32) -> (i32, i32) {
    %c0_i32 = arith.constant 0 : i32
    %c0_i32_0 = arith.constant 0 : i32
    %c0_i32_1 = arith.constant 0 : i32
    return %c0_i32, %c0_i32_0 : i32, i32
  }
  func.func @transform_11(%arg0: i32) -> (i32, i32) {
    %c0_i32 = arith.constant 0 : i32
    %c0_i32_0 = arith.constant 0 : i32
    %c0_i32_1 = arith.constant 0 : i32
    return %c0_i32, %c0_i32_0 : i32, i32
  }
  func.func @transform_12(%arg0: i32) -> (i32, i32) {
    %c0_i32 = arith.constant 0 : i32
    %c0_i32_0 = arith.constant 0 : i32
    %c0_i32_1 = arith.constant 0 : i32
    return %c0_i32, %c0_i32_0 : i32, i32
  }
  func.func @transform_13(%arg0: i32) -> (i32, i32) {
    %c0_i32 = arith.constant 0 : i32
    %c0_i32_0 = arith.constant 0 : i32
    %c0_i32_1 = arith.constant 0 : i32
    return %c0_i32, %c0_i32_0 : i32, i32
  }
  func.func @transform_14(%arg0: i32) -> (i32, i32) {
    %c0_i32 = arith.constant 0 : i32
    %c0_i32_0 = arith.constant 0 : i32
    return %arg0, %c0_i32 : i32, i32
  }
}

</mosaic_0001>

<llo_original>
// kernel: movietenc_forward.1
$region0: #{movietenc_forward.1}
  #allocation0 [shape = 'u32[]', space=smem, size = 0x4, offset = 0x4, fixed_abs, tag = 'smem constant byte address 0x4 - core index']
  #allocation1 [shape = 'u32[144,128]{1,0:T(1,128)}', space=vmem, size = 0x12000, scoped, tag = 'internal scratch']
  %s0 = inlined_call_operand.vmem [shape: f32[8,1], index: 0, kind: input, shape index: {}]
  %s1 = inlined_call_operand.vmem [shape: f32[8,32], index: 1, kind: input, shape index: {}]
  %s2 = inlined_call_operand.vmem [shape: f32[8,32], index: 2, kind: input, shape index: {}]
  %s3 = inlined_call_operand.vmem [shape: f32[8,32], index: 3, kind: input, shape index: {}]
  %s4 = inlined_call_operand.vmem [shape: f32[2,32], index: 4, kind: input, shape index: {}]
  %s5 = inlined_call_operand.vmem [shape: f32[32,64], index: 5, kind: input, shape index: {}]
  %s6 = inlined_call_operand.vmem [shape: f32[64,64], index: 6, kind: input, shape index: {}]
  %s7 = inlined_call_operand.vmem [shape: f32[32,64], index: 7, kind: input, shape index: {}]
  %s8 = inlined_call_operand.vmem [shape: f32[32,64], index: 8, kind: input, shape index: {}]
  %s9 = inlined_call_operand.vmem [shape: f32[32,64], index: 9, kind: input, shape index: {}]
  %s10 = inlined_call_operand.vmem [shape: f32[64,32], index: 10, kind: input, shape index: {}]
  %s11 = inlined_call_operand.vmem [shape: f32[1,64], index: 11, kind: input, shape index: {}]
  %s12 = inlined_call_operand.vmem [shape: f32[1,64], index: 12, kind: input, shape index: {}]
  %s13 = inlined_call_operand.vmem [shape: f32[1,32], index: 13, kind: input, shape index: {}]
  %s14 = inlined_call_operand.hbm [shape: f32[8,32], index: 14, kind: output, shape index: {}]
  %s15 = sld [smem:[#allocation0]]
  $region66: #{movietenc_forward.1} parent=0
    _
  %s17 = ssub.s32 1, %s15
  %s18 = scalar_select 0, %s17, %s15
  $region1: #{movietenc_forward.1} parent=0
    #allocation2 [shape = 'u8[4096]{0}', space=vmem, size = 0x1000, scoped, tag = 'output window, operand 0, single buffered']
    #allocation3 [shape = 's32[1]{0}', space=sflag, size = 0x4, scoped, tag = 'scoped memory for movietenc_forward.1']
    %19 = vsyncpa [#allocation3], 0
    // Predicated region
    $region2: #{movietenc_forward.1} parent=1 // pred_check
      _
    $region3: #{movietenc_forward.1} parent=1 // pred_check_branch
      %21 = sbr.rel (0) target = $region5
    $region4: #{movietenc_forward.1} parent=1 // pred_region
      _
    $region5: #{movietenc_forward.1} parent=1 // pred_fallthru
      _
    // Predicated region
    $region6: #{movietenc_forward.1} parent=1 // pred_check
      _
    $region7: #{movietenc_forward.1} parent=1 // pred_check_branch
      %23 = sbr.rel (0) target = $region9
    $region8: #{movietenc_forward.1} parent=1 // pred_region
      _
    $region9: #{movietenc_forward.1} parent=1 // pred_fallthru
      _
    // Predicated region
    $region10: #{movietenc_forward.1} parent=1 // pred_check
      _
    $region11: #{movietenc_forward.1} parent=1 // pred_check_branch
      %25 = sbr.rel (0) target = $region13
    $region12: #{movietenc_forward.1} parent=1 // pred_region
      _
    $region13: #{movietenc_forward.1} parent=1 // pred_fallthru
      _
    // Predicated region
    $region14: #{movietenc_forward.1} parent=1 // pred_check
      _
    $region15: #{movietenc_forward.1} parent=1 // pred_check_branch
      %27 = sbr.rel (0) target = $region17
    $region16: #{movietenc_forward.1} parent=1 // pred_region
      _
    $region17: #{movietenc_forward.1} parent=1 // pred_fallthru
      _
    // Predicated region
    $region18: #{movietenc_forward.1} parent=1 // pred_check
      _
    $region19: #{movietenc_forward.1} parent=1 // pred_check_branch
      %29 = sbr.rel (0) target = $region21
    $region20: #{movietenc_forward.1} parent=1 // pred_region
      _
    $region21: #{movietenc_forward.1} parent=1 // pred_fallthru
      _
    // Predicated region
    $region22: #{movietenc_forward.1} parent=1 // pred_check
      _
    $region23: #{movietenc_forward.1} parent=1 // pred_check_branch
      %31 = sbr.rel (0) target = $region25
    $region24: #{movietenc_forward.1} parent=1 // pred_region
      _
    $region25: #{movietenc_forward.1} parent=1 // pred_fallthru
      _
    // Predicated region
    $region26: #{movietenc_forward.1} parent=1 // pred_check
      _
    $region27: #{movietenc_forward.1} parent=1 // pred_check_branch
      %33 = sbr.rel (0) target = $region29
    $region28: #{movietenc_forward.1} parent=1 // pred_region
      _
    $region29: #{movietenc_forward.1} parent=1 // pred_fallthru
      _
    // Predicated region
    $region30: #{movietenc_forward.1} parent=1 // pred_check
      _
    $region31: #{movietenc_forward.1} parent=1 // pred_check_branch
      %35 = sbr.rel (0) target = $region33
    $region32: #{movietenc_forward.1} parent=1 // pred_region
      _
    $region33: #{movietenc_forward.1} parent=1 // pred_fallthru
      _
    // Predicated region
    $region34: #{movietenc_forward.1} parent=1 // pred_check
      _
    $region35: #{movietenc_forward.1} parent=1 // pred_check_branch
      %37 = sbr.rel (0) target = $region37
    $region36: #{movietenc_forward.1} parent=1 // pred_region
      _
    $region37: #{movietenc_forward.1} parent=1 // pred_fallthru
      _
    // Predicated region
    $region38: #{movietenc_forward.1} parent=1 // pred_check
      _
    $region39: #{movietenc_forward.1} parent=1 // pred_check_branch
      %39 = sbr.rel (0) target = $region41
    $region40: #{movietenc_forward.1} parent=1 // pred_region
      _
    $region41: #{movietenc_forward.1} parent=1 // pred_fallthru
      _
    // Predicated region
    $region42: #{movietenc_forward.1} parent=1 // pred_check
      _
    $region43: #{movietenc_forward.1} parent=1 // pred_check_branch
      %41 = sbr.rel (0) target = $region45
    $region44: #{movietenc_forward.1} parent=1 // pred_region
      _
    $region45: #{movietenc_forward.1} parent=1 // pred_fallthru
      _
    // Predicated region
    $region46: #{movietenc_forward.1} parent=1 // pred_check
      _
    $region47: #{movietenc_forward.1} parent=1 // pred_check_branch
      %43 = sbr.rel (0) target = $region49
    $region48: #{movietenc_forward.1} parent=1 // pred_region
      _
    $region49: #{movietenc_forward.1} parent=1 // pred_fallthru
      _
    // Predicated region
    $region50: #{movietenc_forward.1} parent=1 // pred_check
      _
    $region51: #{movietenc_forward.1} parent=1 // pred_check_branch
      %45 = sbr.rel (0) target = $region53
    $region52: #{movietenc_forward.1} parent=1 // pred_region
      _
    $region53: #{movietenc_forward.1} parent=1 // pred_fallthru
      _
    // Predicated region
    $region54: #{movietenc_forward.1} parent=1 // pred_check
      _
    $region55: #{movietenc_forward.1} parent=1 // pred_check_branch
      %47 = sbr.rel (0) target = $region57
    $region56: #{movietenc_forward.1} parent=1 // pred_region
      _
    $region57: #{movietenc_forward.1} parent=1 // pred_fallthru
      _
    %v48 = vld [vmem:[%s4] sm:$0x1]
    %v49 = vld [vmem:[%s4 + $0x1] sm:$0x1]
    %v50 = vld [vmem:[%s0] sm:$0xff]
    %52 = vset.pattern.permute.xlu0 0
    %53 = vperm.xlu0 %52, %v50
    %v54 = vpop.permute.xlu0 %53
    %v56 = vlaneseq
    %v57 = vshrl.u32 %v56, 7
    %v58 = vsub.s32 0, %v57
    %v59 = vrot.slane %v48, %v58
    %v60 = vmul.f32 %v54, %v59
    %v61 = vlaneseq
    %v62 = vshrl.u32 %v61, 7
    %v63 = vsub.s32 0, %v62
    %v64 = vrot.slane %v49, %v63
    %v65 = vadd.f32 %v60, %v64
    %v66 = vand.u32 2147483647, %v65
    %vm67 = vcmp.le.f32.partialorder %v66, 0.7853982
    %vm68 = vcmp.lt.s32.totalorder %v65, 0
    %v69 = vand.u32 %v65, 2139095040
    %v70 = vshrl.u32 %v69, 23
    %v71 = vsub.s32 %v70, 127
    %v72 = vand.u32 2147483647, %v65
    %v73 = vand.u32 %v72, 8388607
    %v74 = vor.u32 %v73, 8388608
    %v75 = vsub.s32 0, %v74
    %v76 = vadd.s32 %v71, 1
    %vm77 = vcmp.gt.s32.totalorder %v76, 0
    %v78 = vsel %vm77, %v76, 0
    %v79 = vshrl.u32 %v78, 5
    %v80 = vand.u32 %v78, 31
    %v81 = vsub.s32 32, %v80
    %v82 = vshrl.u32 683565275, %v81
    %v83 = vshll.u32 683565275, %v80
    %v84 = vshrl.u32 2475754826, %v81
    %v85 = vor.u32 %v83, %v84
    %v86 = vshll.u32 2475754826, %v80
    %v87 = vshrl.u32 2131351028, %v81
    %v88 = vor.u32 %v86, %v87
    %v89 = vshll.u32 2131351028, %v80
    %v90 = vshrl.u32 2102212464, %v81
    %v91 = vor.u32 %v89, %v90
    %v92 = vshll.u32 2102212464, %v80
    %v93 = vshrl.u32 920167782, %v81
    %v94 = vor.u32 %v92, %v93
    %v95 = vshll.u32 920167782, %v80
    %v96 = vshrl.u32 1326507024, %v81
    %v97 = vor.u32 %v95, %v96
    %vm98 = vcmp.lt.s32.totalorder %v79, 1
    %vm99 = vcmp.lt.s32.totalorder %v79, 2
    %vm100 = vcmp.lt.s32.totalorder %v79, 3
    %vm101 = vcmp.lt.s32.totalorder %v79, 4
    %v102 = vsel %vm98, %v82, %v85
    %v103 = vsel %vm101, %v91, 2102212464
    %v104 = vsel %vm100, %v88, %v103
    %v105 = vsel %vm99, %v102, %v104
    %v106 = vsel %vm98, %v85, %v88
    %v107 = vsel %vm101, %v94, 920167782
    %v108 = vsel %vm100, %v91, %v107
    %v109 = vsel %vm99, %v106, %v108
    %v110 = vsel %vm98, %v88, %v91
    %v111 = vsel %vm101, %v97, 1326507024
    %v112 = vsel %vm100, %v94, %v111
    %v113 = vsel %vm99, %v110, %v112
    %v114 = vshll.u32 %v74, 8
    %v115 = vmul.u32.u64.compose %v114, %v113
    %v116 = vextract.low.u32 %v115
    %v117 = vextract.high.u32 %v115
    %v118 = vmul.u32.u64.compose %v114, %v109
    %v119 = vextract.low.u32 %v118
    %v120 = vextract.high.u32 %v118
    %v121 = vmul.u32 %v114, %v105
    %v122 = vadd.s32 %v117, %v119
    %vm123 = vc.u32 %v117, %v119
    %v124 = vadd.s32 %v120, 1
    %v125 = vsel %vm123, %v124, %v120
    %v126 = vadd.s32 %v121, %v125
    %v127 = vadd.s32 %v126, 536870912
    %v128 = vshrl.u32 %v127, 30
    %v129 = vshll.u32 %v128, 30
    %v130 = vsub.s32 %v126, %v129
    %vm131 = vcmp.lt.s32.totalorder %v130, 0
    %v132 = vsub.s32 0, %v130
    %v133 = vsel %vm131, %v132, %v130
    %v134 = vclz %v133
    %v135 = vsub.s32 %v134, 2
    %vm136 = vcmp.gt.s32.totalorder 0, %v135
    %v137 = vsel %vm136, 0, %v135
    %v138 = vsub.s32 32, %v137
    %v139 = vshll.u32 %v130, %v137
    %v140 = vshrl.u32 %v122, %v138
    %v141 = vor.u32 %v139, %v140
    %v142 = vsub.s32 4294967266, %v137
    %v143 = vadd.s32 %v142, 127
    %v144 = vshll.u32 %v143, 23
    %v145 = vor.u32 4788187, %v144
    %v146 = vand.u32 2147483647, %v145
    %v148 = vcvt.s32.f32 %v141
    %v149 = vmul.f32 %v148, %v146
    %v150 = vxor.u32 %v149, 2147483648
    %v151 = vsel %vm68, %v150, %v149
    %v152 = vsub.s32 4, %v128
    %v153 = vsel %vm68, %v152, %v128
    %v154 = vsel %vm67, %v65, %v151
    %v155 = vsel %vm67, 0, %v153
    %v156 = vcosq.f32.pop %v154
    %v157 = vsinq.f32.pop %v154
    %vm158 = vweird.f32 %v65
    %v159 = vadd.s32 %v155, 3
    %v160 = vand.u32 %v159, 3
    %vm161 = vcmp.lt.s32.totalorder %v160, 2
    %vm162 = vcmp.eq.s32.totalorder %v160, 0
    %v163 = vxor.u32 %v157, 2147483648
    %v164 = vsel %vm162, %v156, %v163
    %vm165 = vcmp.eq.s32.totalorder %v160, 2
    %v166 = vxor.u32 %v156, 2147483648
    %v167 = vsel %vm165, %v166, %v157
    %v168 = vsel %vm161, %v164, %v167
    %v169 = vsel %vm158, nan, %v168
    %v170 = vld [vmem:[%s5] sm:$0xff]
    %v171 = vld [vmem:[%s5 + $0x8] sm:$0xff]
    %v172 = vld [vmem:[%s5 + $0x10] sm:$0xff]
    %v173 = vld [vmem:[%s5 + $0x18] sm:$0xff]
    %v174 = vld [vmem:[%s11] sm:$0x1]
    %v176 = vlaneseq
    %v177 = vshrl.u32 %v176, 7
    %v178 = vsub.s32 0, %v177
    %v179 = vrot.slane %v174, %v178
    %vm181 = vcmask 261120
    %v183 = vsel %vm181, %v169, 0
    %185 = vmatprep.subr.mxu0 0.0
    %186 = vmatpush1.msra.mxu0 0.0
    %187 = vmatprep.subr.mxu0 0.0
    %188 = vmatpush1.msra.mxu0 0.0
    %189 = vmatprep.subr.mxu0 0.0
    %190 = vmatpush1.msra.mxu0 0.0
    %191 = vmatprep.subr.mxu0 0.0
    %192 = vmatpush1.msra.mxu0 0.0
    %193 = vmatprep.subr.mxu0 0.0
    %194 = vmatpush1.msra.mxu0 0.0
    %195 = vmatprep.subr.mxu0 0.0
    %196 = vmatpush1.msra.mxu0 0.0
    %197 = vmatprep.subr.mxu0 0.0
    %198 = vmatpush1.msra.mxu0 0.0
    %199 = vmatprep.subr.mxu0 0.0
    %200 = vmatpush1.msra.mxu0 0.0
    %201 = vmatprep.subr.mxu0 0.0
    %202 = vmatpush1.msra.mxu0 0.0
    %203 = vmatprep.subr.mxu0 0.0
    %204 = vmatpush1.msra.mxu0 0.0
    %205 = vmatprep.subr.mxu0 0.0
    %206 = vmatpush1.msra.mxu0 0.0
    %207 = vmatprep.subr.mxu0 0.0
    %208 = vmatpush1.msra.mxu0 0.0
    %209 = vmatprep.subr.mxu0 0.0
    %210 = vmatpush1.msra.mxu0 %v173
    %211 = vmatprep.subr.mxu0 0.0
    %212 = vmatpush1.msra.mxu0 %v172
    %213 = vmatprep.subr.mxu0 0.0
    %214 = vmatpush1.msra.mxu0 %v171
    %215 = vmatprep.subr.mxu0 0.0
    %216 = vmatpush1.msra.mxu0 %v170
    %217 = vmatprep.subr.mxu0 0.0
    %218 = vmatpush2.msra.mxu0 0.0
    %219 = vmatprep.subr.mxu0 0.0
    %220 = vmatpush2.msra.mxu0 0.0
    %221 = vmatprep.subr.mxu0 0.0
    %222 = vmatpush2.msra.mxu0 0.0
    %223 = vmatprep.subr.mxu0 0.0
    %224 = vmatpush2.msra.mxu0 0.0
    %225 = vmatprep.subr.mxu0 0.0
    %226 = vmatpush2.msra.mxu0 0.0
    %227 = vmatprep.subr.mxu0 0.0
    %228 = vmatpush2.msra.mxu0 0.0
    %229 = vmatprep.subr.mxu0 0.0
    %230 = vmatpush2.msra.mxu0 0.0
    %231 = vmatprep.subr.mxu0 0.0
    %232 = vmatpush2.msra.mxu0 0.0
    %233 = vmatprep.subr.mxu0 0.0
    %234 = vmatpush2.msra.mxu0 0.0
    %235 = vmatprep.subr.mxu0 0.0
    %236 = vmatpush2.msra.mxu0 0.0
    %237 = vmatprep.subr.mxu0 0.0
    %238 = vmatpush2.msra.mxu0 0.0
    %239 = vmatprep.subr.mxu0 0.0
    %240 = vmatpush2.msra.mxu0 0.0
    %241 = vmatprep.subr.mxu0 0.0
    %242 = vmatpush2.msra.mxu0 0.0
    %243 = vmatprep.subr.mxu0 0.0
    %244 = vmatpush2.msra.mxu0 0.0
    %245 = vmatprep.subr.mxu0 0.0
    %246 = vmatpush2.msra.mxu0 0.0
    %247 = vmatprep.subr.mxu0 0.0
    %248 = vmatpush2.msra.mxu0 0.0
    %249 = vmatprep.mubr.f32.mxu0 0.0
    %250 = vmatmul.mubr.f32.gmra.mxu0 %v183
    %v251 = vpop.f32.mrf.mxu0
    %v252 = vadd.f32 %v179, %v251
    %v253 = vpop.f32.mrf.mxu0
    %254 = vdwg.mxu0
    %v255 = vmul.f32 %v252, 0.70710677
    %vm256 = vcmp.lt.f32.partialorder %v255, 0.0
    %v257 = vsel %vm256, -1.0, 1.0
    %v258 = vand.u32 2147483647, %v255
    %v259 = vmul.f32 %v258, 0.3275911
    %v260 = vadd.f32 %v259, 1.0
    %v261 = vrcp.pop %v260
    %v262 = vmul.f32 1.0, %v261
    %v263 = vmul.f32 %v262, 1.0614054
    %v264 = vadd.f32 %v263, -1.4531521
    %v265 = vmul.f32 %v264, %v262
    %v266 = vadd.f32 %v265, 1.4214138
    %v267 = vmul.f32 %v266, %v262
    %v268 = vadd.f32 %v267, -0.28449672
    %v269 = vmul.f32 %v268, %v262
    %v270 = vadd.f32 %v269, 0.2548296
    %v271 = vmul.f32 %v270, %v262
    %v272 = vsub.f32 0.0, %v258
    %v273 = vmul.f32 %v272, %v258
    %v274 = vmul.f32 %v273, 1.442695
    %v275 = vpow.pop %v274
    %v276 = vmul.f32 %v271, %v275
    %v277 = vsub.f32 1.0, %v276
    %v278 = vmul.f32 %v257, %v277
    %v279 = vmul.f32 %v252, 0.5
    %v280 = vadd.f32 %v278, 1.0
    %v281 = vmul.f32 %v279, %v280
    %v282 = vld [vmem:[%s1] sm:$0xff]
    %v283 = vld [vmem:[%s7] sm:$0xff]
    %v284 = vld [vmem:[%s7 + $0x8] sm:$0xff]
    %v285 = vld [vmem:[%s7 + $0x10] sm:$0xff]
    %v286 = vld [vmem:[%s7 + $0x18] sm:$0xff]
    %v287 = vld [vmem:[%s2] sm:$0xff]
    %v288 = vld [vmem:[%s8] sm:$0xff]
    %v289 = vld [vmem:[%s8 + $0x8] sm:$0xff]
    %v290 = vld [vmem:[%s8 + $0x10] sm:$0xff]
    %v291 = vld [vmem:[%s8 + $0x18] sm:$0xff]
    %v293 = vsel %vm181, %v287, 0
    %295 = vmatprep.subr.mxu0 0.0
    %296 = vmatpush1.msra.mxu0 0.0
    %297 = vmatprep.subr.mxu0 0.0
    %298 = vmatpush1.msra.mxu0 0.0
    %299 = vmatprep.subr.mxu0 0.0
    %300 = vmatpush1.msra.mxu0 0.0
    %301 = vmatprep.subr.mxu0 0.0
    %302 = vmatpush1.msra.mxu0 0.0
    %303 = vmatprep.subr.mxu0 0.0
    %304 = vmatpush1.msra.mxu0 0.0
    %305 = vmatprep.subr.mxu0 0.0
    %306 = vmatpush1.msra.mxu0 0.0
    %307 = vmatprep.subr.mxu0 0.0
    %308 = vmatpush1.msra.mxu0 0.0
    %309 = vmatprep.subr.mxu0 0.0
    %310 = vmatpush1.msra.mxu0 0.0
    %311 = vmatprep.subr.mxu0 0.0
    %312 = vmatpush1.msra.mxu0 0.0
    %313 = vmatprep.subr.mxu0 0.0
    %314 = vmatpush1.msra.mxu0 0.0
    %315 = vmatprep.subr.mxu0 0.0
    %316 = vmatpush1.msra.mxu0 0.0
    %317 = vmatprep.subr.mxu0 0.0
    %318 = vmatpush1.msra.mxu0 0.0
    %319 = vmatprep.subr.mxu0 0.0
    %320 = vmatpush1.msra.mxu0 %v291
    %321 = vmatprep.subr.mxu0 0.0
    %322 = vmatpush1.msra.mxu0 %v290
    %323 = vmatprep.subr.mxu0 0.0
    %324 = vmatpush1.msra.mxu0 %v289
    %325 = vmatprep.subr.mxu0 0.0
    %326 = vmatpush1.msra.mxu0 %v288
    %327 = vmatprep.subr.mxu0 0.0
    %328 = vmatpush2.msra.mxu0 0.0
    %329 = vmatprep.subr.mxu0 0.0
    %330 = vmatpush2.msra.mxu0 0.0
    %331 = vmatprep.subr.mxu0 0.0
    %332 = vmatpush2.msra.mxu0 0.0
    %333 = vmatprep.subr.mxu0 0.0
    %334 = vmatpush2.msra.mxu0 0.0
    %335 = vmatprep.subr.mxu0 0.0
    %336 = vmatpush2.msra.mxu0 0.0
    %337 = vmatprep.subr.mxu0 0.0
    %338 = vmatpush2.msra.mxu0 0.0
    %339 = vmatprep.subr.mxu0 0.0
    %340 = vmatpush2.msra.mxu0 0.0
    %341 = vmatprep.subr.mxu0 0.0
    %342 = vmatpush2.msra.mxu0 0.0
    %343 = vmatprep.subr.mxu0 0.0
    %344 = vmatpush2.msra.mxu0 0.0
    %345 = vmatprep.subr.mxu0 0.0
    %346 = vmatpush2.msra.mxu0 0.0
    %347 = vmatprep.subr.mxu0 0.0
    %348 = vmatpush2.msra.mxu0 0.0
    %349 = vmatprep.subr.mxu0 0.0
    %350 = vmatpush2.msra.mxu0 0.0
    %351 = vmatprep.subr.mxu0 0.0
    %352 = vmatpush2.msra.mxu0 0.0
    %353 = vmatprep.subr.mxu0 0.0
    %354 = vmatpush2.msra.mxu0 0.0
    %355 = vmatprep.subr.mxu0 0.0
    %356 = vmatpush2.msra.mxu0 0.0
    %357 = vmatprep.subr.mxu0 0.0
    %358 = vmatpush2.msra.mxu0 0.0
    %359 = vmatprep.mubr.f32.mxu0 0.0
    %360 = vmatmul.mubr.f32.gmra.mxu0 %v293
    %v361 = vpop.f32.mrf.mxu0
    %v362 = vadd.f32 0.0, %v361
    %v363 = vpop.f32.mrf.mxu0
    %364 = vdwg.mxu0
    %v366 = vsel %vm181, %v282, 0
    %368 = vmatprep.subr.mxu0 0.0
    %369 = vmatpush1.msra.mxu0 0.0
    %370 = vmatprep.subr.mxu0 0.0
    %371 = vmatpush1.msra.mxu0 0.0
    %372 = vmatprep.subr.mxu0 0.0
    %373 = vmatpush1.msra.mxu0 0.0
    %374 = vmatprep.subr.mxu0 0.0
    %375 = vmatpush1.msra.mxu0 0.0
    %376 = vmatprep.subr.mxu0 0.0
    %377 = vmatpush1.msra.mxu0 0.0
    %378 = vmatprep.subr.mxu0 0.0
    %379 = vmatpush1.msra.mxu0 0.0
    %380 = vmatprep.subr.mxu0 0.0
    %381 = vmatpush1.msra.mxu0 0.0
    %382 = vmatprep.subr.mxu0 0.0
    %383 = vmatpush1.msra.mxu0 0.0
    %384 = vmatprep.subr.mxu0 0.0
    %385 = vmatpush1.msra.mxu0 0.0
    %386 = vmatprep.subr.mxu0 0.0
    %387 = vmatpush1.msra.mxu0 0.0
    %388 = vmatprep.subr.mxu0 0.0
    %389 = vmatpush1.msra.mxu0 0.0
    %390 = vmatprep.subr.mxu0 0.0
    %391 = vmatpush1.msra.mxu0 0.0
    %392 = vmatprep.subr.mxu0 0.0
    %393 = vmatpush1.msra.mxu0 %v286
    %394 = vmatprep.subr.mxu0 0.0
    %395 = vmatpush1.msra.mxu0 %v285
    %396 = vmatprep.subr.mxu0 0.0
    %397 = vmatpush1.msra.mxu0 %v284
    %398 = vmatprep.subr.mxu0 0.0
    %399 = vmatpush1.msra.mxu0 %v283
    %400 = vmatprep.subr.mxu0 0.0
    %401 = vmatpush2.msra.mxu0 0.0
    %402 = vmatprep.subr.mxu0 0.0
    %403 = vmatpush2.msra.mxu0 0.0
    %404 = vmatprep.subr.mxu0 0.0
    %405 = vmatpush2.msra.mxu0 0.0
    %406 = vmatprep.subr.mxu0 0.0
    %407 = vmatpush2.msra.mxu0 0.0
    %408 = vmatprep.subr.mxu0 0.0
    %409 = vmatpush2.msra.mxu0 0.0
    %410 = vmatprep.subr.mxu0 0.0
    %411 = vmatpush2.msra.mxu0 0.0
    %412 = vmatprep.subr.mxu0 0.0
    %413 = vmatpush2.msra.mxu0 0.0
    %414 = vmatprep.subr.mxu0 0.0
    %415 = vmatpush2.msra.mxu0 0.0
    %416 = vmatprep.subr.mxu0 0.0
    %417 = vmatpush2.msra.mxu0 0.0
    %418 = vmatprep.subr.mxu0 0.0
    %419 = vmatpush2.msra.mxu0 0.0
    %420 = vmatprep.subr.mxu0 0.0
    %421 = vmatpush2.msra.mxu0 0.0
    %422 = vmatprep.subr.mxu0 0.0
    %423 = vmatpush2.msra.mxu0 0.0
    %424 = vmatprep.subr.mxu0 0.0
    %425 = vmatpush2.msra.mxu0 0.0
    %426 = vmatprep.subr.mxu0 0.0
    %427 = vmatpush2.msra.mxu0 0.0
    %428 = vmatprep.subr.mxu0 0.0
    %429 = vmatpush2.msra.mxu0 0.0
    %430 = vmatprep.subr.mxu0 0.0
    %431 = vmatpush2.msra.mxu0 0.0
    %432 = vmatprep.mubr.f32.mxu0 0.0
    %433 = vmatmul.mubr.f32.gmra.mxu0 %v366
    %v434 = vpop.f32.mrf.mxu0
    %v435 = vadd.f32 %v362, %v434
    %v436 = vpop.f32.mrf.mxu0
    %437 = vdwg.mxu0
    %v438 = vld [vmem:[%s3] sm:$0xff]
    %v439 = vld [vmem:[%s9] sm:$0xff]
    %v440 = vld [vmem:[%s9 + $0x8] sm:$0xff]
    %v441 = vld [vmem:[%s9 + $0x10] sm:$0xff]
    %v442 = vld [vmem:[%s9 + $0x18] sm:$0xff]
    %v444 = vsel %vm181, %v438, 0
    %446 = vmatprep.subr.mxu0 0.0
    %447 = vmatpush1.msra.mxu0 0.0
    %448 = vmatprep.subr.mxu0 0.0
    %449 = vmatpush1.msra.mxu0 0.0
    %450 = vmatprep.subr.mxu0 0.0
    %451 = vmatpush1.msra.mxu0 0.0
    %452 = vmatprep.subr.mxu0 0.0
    %453 = vmatpush1.msra.mxu0 0.0
    %454 = vmatprep.subr.mxu0 0.0
    %455 = vmatpush1.msra.mxu0 0.0
    %456 = vmatprep.subr.mxu0 0.0
    %457 = vmatpush1.msra.mxu0 0.0
    %458 = vmatprep.subr.mxu0 0.0
    %459 = vmatpush1.msra.mxu0 0.0
    %460 = vmatprep.subr.mxu0 0.0
    %461 = vmatpush1.msra.mxu0 0.0
    %462 = vmatprep.subr.mxu0 0.0
    %463 = vmatpush1.msra.mxu0 0.0
    %464 = vmatprep.subr.mxu0 0.0
    %465 = vmatpush1.msra.mxu0 0.0
    %466 = vmatprep.subr.mxu0 0.0
    %467 = vmatpush1.msra.mxu0 0.0
    %468 = vmatprep.subr.mxu0 0.0
    %469 = vmatpush1.msra.mxu0 0.0
    %470 = vmatprep.subr.mxu0 0.0
    %471 = vmatpush1.msra.mxu0 %v442
    %472 = vmatprep.subr.mxu0 0.0
    %473 = vmatpush1.msra.mxu0 %v441
    %474 = vmatprep.subr.mxu0 0.0
    %475 = vmatpush1.msra.mxu0 %v440
    %476 = vmatprep.subr.mxu0 0.0
    %477 = vmatpush1.msra.mxu0 %v439
    %478 = vmatprep.subr.mxu0 0.0
    %479 = vmatpush2.msra.mxu0 0.0
    %480 = vmatprep.subr.mxu0 0.0
    %481 = vmatpush2.msra.mxu0 0.0
    %482 = vmatprep.subr.mxu0 0.0
    %483 = vmatpush2.msra.mxu0 0.0
    %484 = vmatprep.subr.mxu0 0.0
    %485 = vmatpush2.msra.mxu0 0.0
    %486 = vmatprep.subr.mxu0 0.0
    %487 = vmatpush2.msra.mxu0 0.0
    %488 = vmatprep.subr.mxu0 0.0
    %489 = vmatpush2.msra.mxu0 0.0
    %490 = vmatprep.subr.mxu0 0.0
    %491 = vmatpush2.msra.mxu0 0.0
    %492 = vmatprep.subr.mxu0 0.0
    %493 = vmatpush2.msra.mxu0 0.0
    %494 = vmatprep.subr.mxu0 0.0
    %495 = vmatpush2.msra.mxu0 0.0
    %496 = vmatprep.subr.mxu0 0.0
    %497 = vmatpush2.msra.mxu0 0.0
    %498 = vmatprep.subr.mxu0 0.0
    %499 = vmatpush2.msra.mxu0 0.0
    %500 = vmatprep.subr.mxu0 0.0
    %501 = vmatpush2.msra.mxu0 0.0
    %502 = vmatprep.subr.mxu0 0.0
    %503 = vmatpush2.msra.mxu0 0.0
    %504 = vmatprep.subr.mxu0 0.0
    %505 = vmatpush2.msra.mxu0 0.0
    %506 = vmatprep.subr.mxu0 0.0
    %507 = vmatpush2.msra.mxu0 0.0
    %508 = vmatprep.subr.mxu0 0.0
    %509 = vmatpush2.msra.mxu0 0.0
    %510 = vmatprep.mubr.f32.mxu0 0.0
    %511 = vmatmul.mubr.f32.gmra.mxu0 %v444
    %v512 = vpop.f32.mrf.mxu0
    %v513 = vadd.f32 0.0, %v512
    %v514 = vpop.f32.mrf.mxu0
    %515 = vdwg.mxu0
    %v516 = vadd.f32 %v435, %v513
    %v517 = vld [vmem:[%s6] sm:$0xff]
    %v518 = vld [vmem:[%s6 + $0x8] sm:$0xff]
    %v519 = vld [vmem:[%s6 + $0x10] sm:$0xff]
    %v520 = vld [vmem:[%s6 + $0x18] sm:$0xff]
    %v521 = vld [vmem:[%s6 + $0x20] sm:$0xff]
    %v522 = vld [vmem:[%s6 + $0x28] sm:$0xff]
    %v523 = vld [vmem:[%s6 + $0x30] sm:$0xff]
    %v524 = vld [vmem:[%s6 + $0x38] sm:$0xff]
    %vm525 = vcmask 523264
    %v527 = vsel %vm525, %v281, 0
    %529 = vmatprep.subr.mxu0 0.0
    %530 = vmatpush1.msra.mxu0 0.0
    %531 = vmatprep.subr.mxu0 0.0
    %532 = vmatpush1.msra.mxu0 0.0
    %533 = vmatprep.subr.mxu0 0.0
    %534 = vmatpush1.msra.mxu0 0.0
    %535 = vmatprep.subr.mxu0 0.0
    %536 = vmatpush1.msra.mxu0 0.0
    %537 = vmatprep.subr.mxu0 0.0
    %538 = vmatpush1.msra.mxu0 0.0
    %539 = vmatprep.subr.mxu0 0.0
    %540 = vmatpush1.msra.mxu0 0.0
    %541 = vmatprep.subr.mxu0 0.0
    %542 = vmatpush1.msra.mxu0 0.0
    %543 = vmatprep.subr.mxu0 0.0
    %544 = vmatpush1.msra.mxu0 0.0
    %545 = vmatprep.subr.mxu0 0.0
    %546 = vmatpush1.msra.mxu0 %v524
    %547 = vmatprep.subr.mxu0 0.0
    %548 = vmatpush1.msra.mxu0 %v523
    %549 = vmatprep.subr.mxu0 0.0
    %550 = vmatpush1.msra.mxu0 %v522
    %551 = vmatprep.subr.mxu0 0.0
    %552 = vmatpush1.msra.mxu0 %v521
    %553 = vmatprep.subr.mxu0 0.0
    %554 = vmatpush1.msra.mxu0 %v520
    %555 = vmatprep.subr.mxu0 0.0
    %556 = vmatpush1.msra.mxu0 %v519
    %557 = vmatprep.subr.mxu0 0.0
    %558 = vmatpush1.msra.mxu0 %v518
    %559 = vmatprep.subr.mxu0 0.0
    %560 = vmatpush1.msra.mxu0 %v517
    %561 = vmatprep.subr.mxu0 0.0
    %562 = vmatpush2.msra.mxu0 0.0
    %563 = vmatprep.subr.mxu0 0.0
    %564 = vmatpush2.msra.mxu0 0.0
    %565 = vmatprep.subr.mxu0 0.0
    %566 = vmatpush2.msra.mxu0 0.0
    %567 = vmatprep.subr.mxu0 0.0
    %568 = vmatpush2.msra.mxu0 0.0
    %569 = vmatprep.subr.mxu0 0.0
    %570 = vmatpush2.msra.mxu0 0.0
    %571 = vmatprep.subr.mxu0 0.0
    %572 = vmatpush2.msra.mxu0 0.0
    %573 = vmatprep.subr.mxu0 0.0
    %574 = vmatpush2.msra.mxu0 0.0
    %575 = vmatprep.subr.mxu0 0.0
    %576 = vmatpush2.msra.mxu0 0.0
    %577 = vmatprep.subr.mxu0 0.0
    %578 = vmatpush2.msra.mxu0 0.0
    %579 = vmatprep.subr.mxu0 0.0
    %580 = vmatpush2.msra.mxu0 0.0
    %581 = vmatprep.subr.mxu0 0.0
    %582 = vmatpush2.msra.mxu0 0.0
    %583 = vmatprep.subr.mxu0 0.0
    %584 = vmatpush2.msra.mxu0 0.0
    %585 = vmatprep.subr.mxu0 0.0
    %586 = vmatpush2.msra.mxu0 0.0
    %587 = vmatprep.subr.mxu0 0.0
    %588 = vmatpush2.msra.mxu0 0.0
    %589 = vmatprep.subr.mxu0 0.0
    %590 = vmatpush2.msra.mxu0 0.0
    %591 = vmatprep.subr.mxu0 0.0
    %592 = vmatpush2.msra.mxu0 0.0
    %593 = vmatprep.mubr.f32.mxu0 0.0
    %594 = vmatmul.mubr.f32.gmra.mxu0 %v527
    %v595 = vpop.f32.mrf.mxu0
    %v596 = vadd.f32 0.0, %v595
    %v597 = vpop.f32.mrf.mxu0
    %598 = vdwg.mxu0
    %v599 = vadd.f32 %v516, %v596
    %v600 = vld [vmem:[%s12] sm:$0x1]
    %v602 = vlaneseq
    %v603 = vshrl.u32 %v602, 7
    %v604 = vsub.s32 0, %v603
    %v605 = vrot.slane %v600, %v604
    %v607 = vadd.f32 %v599, %v605
    %v608 = vmul.f32 %v607, 0.70710677
    %vm609 = vcmp.lt.f32.partialorder %v608, 0.0
    %v610 = vsel %vm609, -1.0, 1.0
    %v611 = vand.u32 2147483647, %v608
    %v612 = vmul.f32 %v611, 0.3275911
    %v613 = vadd.f32 %v612, 1.0
    %v614 = vrcp.pop %v613
    %v615 = vmul.f32 1.0, %v614
    %v616 = vmul.f32 %v615, 1.0614054
    %v617 = vadd.f32 %v616, -1.4531521
    %v618 = vmul.f32 %v617, %v615
    %v619 = vadd.f32 %v618, 1.4214138
    %v620 = vmul.f32 %v619, %v615
    %v621 = vadd.f32 %v620, -0.28449672
    %v622 = vmul.f32 %v621, %v615
    %v623 = vadd.f32 %v622, 0.2548296
    %v624 = vmul.f32 %v623, %v615
    %v625 = vsub.f32 0.0, %v611
    %v626 = vmul.f32 %v625, %v611
    %v627 = vmul.f32 %v626, 1.442695
    %v628 = vpow.pop %v627
    %v629 = vmul.f32 %v624, %v628
    %v630 = vsub.f32 1.0, %v629
    %v631 = vmul.f32 %v610, %v630
    %v632 = vmul.f32 %v607, 0.5
    %v633 = vadd.f32 %v631, 1.0
    %v634 = vmul.f32 %v632, %v633
    %v635 = vld [vmem:[%s10] sm:$0xff]
    %v636 = vld [vmem:[%s10 + $0x8] sm:$0xff]
    %v637 = vld [vmem:[%s10 + $0x10] sm:$0xff]
    %v638 = vld [vmem:[%s10 + $0x18] sm:$0xff]
    %v639 = vld [vmem:[%s10 + $0x20] sm:$0xff]
    %v640 = vld [vmem:[%s10 + $0x28] sm:$0xff]
    %v641 = vld [vmem:[%s10 + $0x30] sm:$0xff]
    %v642 = vld [vmem:[%s10 + $0x38] sm:$0xff]
    %v643 = vld [vmem:[%s13] sm:$0x1]
    %v645 = vlaneseq
    %v646 = vshrl.u32 %v645, 7
    %v647 = vsub.s32 0, %v646
    %v648 = vrot.slane %v643, %v647
    %v651 = vsel %vm525, %v634, 0
    %653 = vmatprep.subr.mxu0 0.0
    %654 = vmatpush1.msra.mxu0 0.0
    %655 = vmatprep.subr.mxu0 0.0
    %656 = vmatpush1.msra.mxu0 0.0
    %657 = vmatprep.subr.mxu0 0.0
    %658 = vmatpush1.msra.mxu0 0.0
    %659 = vmatprep.subr.mxu0 0.0
    %660 = vmatpush1.msra.mxu0 0.0
    %661 = vmatprep.subr.mxu0 0.0
    %662 = vmatpush1.msra.mxu0 0.0
    %663 = vmatprep.subr.mxu0 0.0
    %664 = vmatpush1.msra.mxu0 0.0
    %665 = vmatprep.subr.mxu0 0.0
    %666 = vmatpush1.msra.mxu0 0.0
    %667 = vmatprep.subr.mxu0 0.0
    %668 = vmatpush1.msra.mxu0 0.0
    %669 = vmatprep.subr.mxu0 0.0
    %670 = vmatpush1.msra.mxu0 %v642
    %671 = vmatprep.subr.mxu0 0.0
    %672 = vmatpush1.msra.mxu0 %v641
    %673 = vmatprep.subr.mxu0 0.0
    %674 = vmatpush1.msra.mxu0 %v640
    %675 = vmatprep.subr.mxu0 0.0
    %676 = vmatpush1.msra.mxu0 %v639
    %677 = vmatprep.subr.mxu0 0.0
    %678 = vmatpush1.msra.mxu0 %v638
    %679 = vmatprep.subr.mxu0 0.0
    %680 = vmatpush1.msra.mxu0 %v637
    %681 = vmatprep.subr.mxu0 0.0
    %682 = vmatpush1.msra.mxu0 %v636
    %683 = vmatprep.subr.mxu0 0.0
    %684 = vmatpush1.msra.mxu0 %v635
    %685 = vmatprep.subr.mxu0 0.0
    %686 = vmatpush2.msra.mxu0 0.0
    %687 = vmatprep.subr.mxu0 0.0
    %688 = vmatpush2.msra.mxu0 0.0
    %689 = vmatprep.subr.mxu0 0.0
    %690 = vmatpush2.msra.mxu0 0.0
    %691 = vmatprep.subr.mxu0 0.0
    %692 = vmatpush2.msra.mxu0 0.0
    %693 = vmatprep.subr.mxu0 0.0
    %694 = vmatpush2.msra.mxu0 0.0
    %695 = vmatprep.subr.mxu0 0.0
    %696 = vmatpush2.msra.mxu0 0.0
    %697 = vmatprep.subr.mxu0 0.0
    %698 = vmatpush2.msra.mxu0 0.0
    %699 = vmatprep.subr.mxu0 0.0
    %700 = vmatpush2.msra.mxu0 0.0
    %701 = vmatprep.subr.mxu0 0.0
    %702 = vmatpush2.msra.mxu0 0.0
    %703 = vmatprep.subr.mxu0 0.0
    %704 = vmatpush2.msra.mxu0 0.0
    %705 = vmatprep.subr.mxu0 0.0
    %706 = vmatpush2.msra.mxu0 0.0
    %707 = vmatprep.subr.mxu0 0.0
    %708 = vmatpush2.msra.mxu0 0.0
    %709 = vmatprep.subr.mxu0 0.0
    %710 = vmatpush2.msra.mxu0 0.0
    %711 = vmatprep.subr.mxu0 0.0
    %712 = vmatpush2.msra.mxu0 0.0
    %713 = vmatprep.subr.mxu0 0.0
    %714 = vmatpush2.msra.mxu0 0.0
    %715 = vmatprep.subr.mxu0 0.0
    %716 = vmatpush2.msra.mxu0 0.0
    %717 = vmatprep.mubr.f32.mxu0 0.0
    %718 = vmatmul.mubr.f32.gmra.mxu0 %v651
    %v719 = vpop.f32.mrf.mxu0
    %v720 = vadd.f32 %v648, %v719
    %v721 = vpop.f32.mrf.mxu0
    %722 = vdwg.mxu0
    %723 = vst.msk [vmem:[#allocation2] sm:$0xff] %vm181, %v720
    // Predicated region
    $region58: #{movietenc_forward.1} parent=1 // pred_check
      _
    $region59: #{movietenc_forward.1} parent=1 // pred_check_branch
      %725 = sbr.rel (0) target = $region61
    $region60: #{movietenc_forward.1} parent=1 // pred_region
      %s727 = ssub.s32 128, 128
      %728 = vsyncadd [#allocation3], %s727
      %s730 = sshll.u32 [#allocation2], 4
      %s731 = int_to_ptr.vmem [resolvable:$true] %s730
      %733 = dma.vmem_to_hbm [thread:$0]  %s731, 128, %s14, [#allocation3]
    $region61: #{movietenc_forward.1} parent=1 // pred_fallthru
      _
    // Predicated region
    $region62: #{movietenc_forward.1} parent=1 // pred_check
      _
    $region63: #{movietenc_forward.1} parent=1 // pred_check_branch
      %735 = sbr.rel (0) target = $region65
    $region64: #{movietenc_forward.1} parent=1 // pred_region
      %736 = dma.done [#allocation3], 128
    $region65: #{movietenc_forward.1} parent=1 // pred_fallthru
      _
    %737 = vsyncpa [#allocation3], 1

</llo_original>
